<compile_context>
chip_gen: v7x
topology: tpu7x:2x2x1
jax: 0.10.0
libtpu: 0.0.40
codegen_flags: <defaults>
</compile_context>

<pallas_src>
import jax
import jax.numpy as jnp
from jax.experimental import pallas as pl
from jax.experimental.pallas import tpu as pltpu

H = 128  # lane-padded hidden / output width


def dqn_mlp_kernel(x_ref, w1_ref, w2_ref, w3_ref, w4_ref, b_ref, o_ref):
    """Fused 4-layer MLP on one (TB, in_dim) batch tile; all widths 128-lane padded."""
    x = x_ref[...]
    h = jnp.dot(x, w1_ref[...], preferred_element_type=jnp.float32) + b_ref[0:1, :]
    h = jnp.maximum(h, 0.0)
    h = jnp.dot(h, w2_ref[...], preferred_element_type=jnp.float32) + b_ref[1:2, :]
    h = jnp.maximum(h, 0.0)
    h = jnp.dot(h, w3_ref[...], preferred_element_type=jnp.float32) + b_ref[2:3, :]
    h = jnp.maximum(h, 0.0)
    o_ref[...] = (jnp.dot(h, w4_ref[...], preferred_element_type=jnp.float32)
                  + b_ref[3:4, :]).astype(o_ref.dtype)


def init_params(key, input_dim=5, output_dim=3):
    """Deterministic synthetic params, stored transposed to (in, out); bias (1, out)."""
    dims = [(input_dim, 128), (128, 128), (128, 64), (64, output_dim)]
    params = {}
    keys = jax.random.split(key, 2 * len(dims))
    for i, (din, dout) in enumerate(dims):
        bound = 1.0 / jnp.sqrt(jnp.float32(din))
        params[f"w{i+1}"] = jax.random.uniform(
            keys[2 * i], (din, dout), jnp.float32, -bound, bound)
        params[f"b{i+1}"] = jax.random.uniform(
            keys[2 * i + 1], (1, dout), jnp.float32, -bound, bound)
    return params


def pad_params(params):
    """Zero-pad layer 3/4 to 128 lanes and pack all biases into one (4, 128) array."""
    w1 = params["w1"]                                                      # (in, 128)
    w2 = params["w2"]                                                      # (128, 128)
    w3 = jnp.pad(params["w3"], ((0, 0), (0, H - params["w3"].shape[1])))   # (128, 128)
    w4 = jnp.pad(params["w4"], ((0, H - params["w4"].shape[0]),
                                (0, H - params["w4"].shape[1])))           # (128, 128)
    b = jnp.concatenate([
        params["b1"],
        params["b2"],
        jnp.pad(params["b3"], ((0, 0), (0, H - params["b3"].shape[1]))),
        jnp.pad(params["b4"], ((0, 0), (0, H - params["b4"].shape[1]))),
    ], axis=0)                                                             # (4, 128)
    return w1, w2, w3, w4, b


def dqn_forward(x, padded_params, out_dim, block_b=512):
    """x: (B, in_dim) float32. padded_params: output of pad_params(). -> (B, out_dim)."""
    w1, w2, w3, w4, b = padded_params
    B, in_dim = x.shape
    # Batch tile: 256+ rows fill the MXU M dimension on v6e/v7x; small batches run
    # as a single 8-row-aligned block.
    tb = block_b if B >= block_b else max(8, ((B + 7) // 8) * 8)
    b_pad = ((B + tb - 1) // tb) * tb
    if b_pad != B:
        x = jnp.pad(x, ((0, b_pad - B), (0, 0)))

    const = lambda i: (0, 0)  # weights/biases: same block every step -> VMEM-resident
    out = pl.pallas_call(
        dqn_mlp_kernel,
        out_shape=jax.ShapeDtypeStruct((b_pad, H), jnp.float32),
        grid=(b_pad // tb,),
        in_specs=[
            pl.BlockSpec((tb, in_dim), lambda i: (i, 0)),   # pipelined batch tile
            pl.BlockSpec((in_dim, H), const),
            pl.BlockSpec((H, H), const),
            pl.BlockSpec((H, H), const),
            pl.BlockSpec((H, H), const),
            pl.BlockSpec((4, H), const),                    # packed biases
        ],
        out_specs=pl.BlockSpec((tb, H), lambda i: (i, 0)),  # lane-dense 128-wide slab
        compiler_params=pltpu.CompilerParams(
            dimension_semantics=("parallel",)),             # v7x: split batch over 2 TCs
    )(x, w1, w2, w3, w4, b)
    # Padded lanes/rows are exactly zero -> safe to slice back to logical shape.
    return out[:B, :out_dim]


def dqn_reference(x, params):
    h = jnp.maximum(x @ params["w1"] + params["b1"], 0.0)
    h = jnp.maximum(h @ params["w2"] + params["b2"], 0.0)
    h = jnp.maximum(h @ params["w3"] + params["b3"], 0.0)
    return h @ params["w4"] + params["b4"]


if __name__ == "__main__":
    key = jax.random.PRNGKey(0)
    k_params, k_x1, k_x2 = jax.random.split(key, 3)

    input_dim, output_dim = 5, 3
    params = init_params(k_params, input_dim, output_dim)
    padded = pad_params(params)

    # Small batch (original test shape): single 8-row block, grid of 1.
    x_small = jax.random.normal(k_x1, (8, input_dim), jnp.float32)
    out_small = jax.block_until_ready(dqn_forward(x_small, padded, output_dim))
    ref_small = dqn_reference(x_small, params)
    assert out_small.shape == (8, output_dim), out_small.shape
    assert jnp.allclose(out_small, ref_small, atol=1e-4, rtol=1e-4), "small-batch mismatch"

    # Larger batch exercising the pipelined batch grid + tail padding.
    x_big = jax.random.normal(k_x2, (600, input_dim), jnp.float32)
    out_big = jax.block_until_ready(dqn_forward(x_big, padded, output_dim))
    ref_big = dqn_reference(x_big, params)
    assert out_big.shape == (600, output_dim), out_big.shape
    assert jnp.allclose(out_big, ref_big, atol=1e-4, rtol=1e-4), "big-batch mismatch"

    print("KERNEL_OK")
</pallas_src>

<mosaic_0001>
module attributes {stable_mosaic.version = 11 : i64} {
  func.func @dqn_mlp_kernel(%arg0: i32, %arg1: memref<8x5xf32, #tpu.memory_space<vmem>>, %arg2: memref<5x128xf32, #tpu.memory_space<vmem>>, %arg3: memref<128x128xf32, #tpu.memory_space<vmem>>, %arg4: memref<128x128xf32, #tpu.memory_space<vmem>>, %arg5: memref<128x128xf32, #tpu.memory_space<vmem>>, %arg6: memref<4x128xf32, #tpu.memory_space<vmem>>, %arg7: memref<8x128xf32, #tpu.memory_space<vmem>>) attributes {dimension_semantics = [#tpu.dimension_semantics<parallel>], iteration_bounds = array<i64: 1>, scalar_prefetch = 0 : i64, scratch_operands = 0 : i64, tpu.core_type = #tpu.core_type<tc>, window_params = [{transform_indices = @transform_0, window_bounds = array<i64: 8, 5>}, {pipeline_mode = #tpu.pipeline_mode<synchronous>, transform_indices = @transform_1, window_bounds = array<i64: 5, 128>}, {pipeline_mode = #tpu.pipeline_mode<synchronous>, transform_indices = @transform_2, window_bounds = array<i64: 128, 128>}, {pipeline_mode = #tpu.pipeline_mode<synchronous>, transform_indices = @transform_3, window_bounds = array<i64: 128, 128>}, {pipeline_mode = #tpu.pipeline_mode<synchronous>, transform_indices = @transform_4, window_bounds = array<i64: 128, 128>}, {pipeline_mode = #tpu.pipeline_mode<synchronous>, transform_indices = @transform_5, window_bounds = array<i64: 4, 128>}, {transform_indices = @transform_6, window_bounds = array<i64: 8, 128>}]} {
    %c0 = arith.constant 0 : index
    %c0_0 = arith.constant 0 : index
    %0 = vector.load %arg1[%c0, %c0_0] : memref<8x5xf32, #tpu.memory_space<vmem>>, vector<8x5xf32>
    %c0_1 = arith.constant 0 : index
    %c0_2 = arith.constant 0 : index
    %1 = vector.load %arg2[%c0_1, %c0_2] : memref<5x128xf32, #tpu.memory_space<vmem>>, vector<5x128xf32>
    %cst = arith.constant dense<0.000000e+00> : vector<8x128xf32>
    %2 = tpu.matmul %0, %1, %cst {dimension_numbers = #tpu.dot_dimension_numbers<[1], [0], [0], [1], [0, 0, 1, 1], [], []>} : vector<8x5xf32>, vector<5x128xf32>, vector<8x128xf32> -> vector<8x128xf32>
    %c0_3 = arith.constant 0 : index
    %c0_4 = arith.constant 0 : index
    %3 = vector.load %arg6[%c0_3, %c0_4] : memref<4x128xf32, #tpu.memory_space<vmem>>, vector<1x128xf32>
    %4 = vector.broadcast %3 : vector<1x128xf32> to vector<8x128xf32>
    %5 = arith.addf %2, %4 : vector<8x128xf32>
    %cst_5 = arith.constant 0.000000e+00 : f32
    %6 = vector.broadcast %cst_5 : f32 to vector<8x128xf32>
    %7 = arith.maximumf %5, %6 : vector<8x128xf32>
    %c0_6 = arith.constant 0 : index
    %c0_7 = arith.constant 0 : index
    %8 = vector.load %arg3[%c0_6, %c0_7] : memref<128x128xf32, #tpu.memory_space<vmem>>, vector<128x128xf32>
    %cst_8 = arith.constant dense<0.000000e+00> : vector<8x128xf32>
    %9 = tpu.matmul %7, %8, %cst_8 {dimension_numbers = #tpu.dot_dimension_numbers<[1], [0], [0], [1], [0, 0, 1, 1], [], []>} : vector<8x128xf32>, vector<128x128xf32>, vector<8x128xf32> -> vector<8x128xf32>
    %c1 = arith.constant 1 : index
    %c0_9 = arith.constant 0 : index
    %10 = vector.load %arg6[%c1, %c0_9] : memref<4x128xf32, #tpu.memory_space<vmem>>, vector<1x128xf32>
    %11 = vector.broadcast %10 : vector<1x128xf32> to vector<8x128xf32>
    %12 = arith.addf %9, %11 : vector<8x128xf32>
    %cst_10 = arith.constant 0.000000e+00 : f32
    %13 = vector.broadcast %cst_10 : f32 to vector<8x128xf32>
    %14 = arith.maximumf %12, %13 : vector<8x128xf32>
    %c0_11 = arith.constant 0 : index
    %c0_12 = arith.constant 0 : index
    %15 = vector.load %arg4[%c0_11, %c0_12] : memref<128x128xf32, #tpu.memory_space<vmem>>, vector<128x128xf32>
    %cst_13 = arith.constant dense<0.000000e+00> : vector<8x128xf32>
    %16 = tpu.matmul %14, %15, %cst_13 {dimension_numbers = #tpu.dot_dimension_numbers<[1], [0], [0], [1], [0, 0, 1, 1], [], []>} : vector<8x128xf32>, vector<128x128xf32>, vector<8x128xf32> -> vector<8x128xf32>
    %c2 = arith.constant 2 : index
    %c0_14 = arith.constant 0 : index
    %17 = vector.load %arg6[%c2, %c0_14] : memref<4x128xf32, #tpu.memory_space<vmem>>, vector<1x128xf32>
    %18 = vector.broadcast %17 : vector<1x128xf32> to vector<8x128xf32>
    %19 = arith.addf %16, %18 : vector<8x128xf32>
    %cst_15 = arith.constant 0.000000e+00 : f32
    %20 = vector.broadcast %cst_15 : f32 to vector<8x128xf32>
    %21 = arith.maximumf %19, %20 : vector<8x128xf32>
    %c0_16 = arith.constant 0 : index
    %c0_17 = arith.constant 0 : index
    %22 = vector.load %arg5[%c0_16, %c0_17] : memref<128x128xf32, #tpu.memory_space<vmem>>, vector<128x128xf32>
    %cst_18 = arith.constant dense<0.000000e+00> : vector<8x128xf32>
    %23 = tpu.matmul %21, %22, %cst_18 {dimension_numbers = #tpu.dot_dimension_numbers<[1], [0], [0], [1], [0, 0, 1, 1], [], []>} : vector<8x128xf32>, vector<128x128xf32>, vector<8x128xf32> -> vector<8x128xf32>
    %c3 = arith.constant 3 : index
    %c0_19 = arith.constant 0 : index
    %24 = vector.load %arg6[%c3, %c0_19] : memref<4x128xf32, #tpu.memory_space<vmem>>, vector<1x128xf32>
    %25 = vector.broadcast %24 : vector<1x128xf32> to vector<8x128xf32>
    %26 = arith.addf %23, %25 : vector<8x128xf32>
    %c0_20 = arith.constant 0 : index
    %c0_21 = arith.constant 0 : index
    %27 = vector.load %arg7[%c0_20, %c0_21] : memref<8x128xf32, #tpu.memory_space<vmem>>, vector<8x128xf32>
    tpu.vector_store %arg7[%c0_20, %c0_21], %26 {strides = array<i32>} : memref<8x128xf32, #tpu.memory_space<vmem>>, vector<8x128xf32>,
    return
  }
  func.func @transform_0(%arg0: i32) -> (i32, i32) {
    %c0_i32 = arith.constant 0 : i32
    %c0_i32_0 = arith.constant 0 : i32
    return %arg0, %c0_i32 : i32, i32
  }
  func.func @transform_1(%arg0: i32) -> (i32, i32) {
    %c0_i32 = arith.constant 0 : i32
    %c0_i32_0 = arith.constant 0 : i32
    %c0_i32_1 = arith.constant 0 : i32
    return %c0_i32, %c0_i32_0 : i32, i32
  }
  func.func @transform_2(%arg0: i32) -> (i32, i32) {
    %c0_i32 = arith.constant 0 : i32
    %c0_i32_0 = arith.constant 0 : i32
    %c0_i32_1 = arith.constant 0 : i32
    return %c0_i32, %c0_i32_0 : i32, i32
  }
  func.func @transform_3(%arg0: i32) -> (i32, i32) {
    %c0_i32 = arith.constant 0 : i32
    %c0_i32_0 = arith.constant 0 : i32
    %c0_i32_1 = arith.constant 0 : i32
    return %c0_i32, %c0_i32_0 : i32, i32
  }
  func.func @transform_4(%arg0: i32) -> (i32, i32) {
    %c0_i32 = arith.constant 0 : i32
    %c0_i32_0 = arith.constant 0 : i32
    %c0_i32_1 = arith.constant 0 : i32
    return %c0_i32, %c0_i32_0 : i32, i32
  }
  func.func @transform_5(%arg0: i32) -> (i32, i32) {
    %c0_i32 = arith.constant 0 : i32
    %c0_i32_0 = arith.constant 0 : i32
    %c0_i32_1 = arith.constant 0 : i32
    return %c0_i32, %c0_i32_0 : i32, i32
  }
  func.func @transform_6(%arg0: i32) -> (i32, i32) {
    %c0_i32 = arith.constant 0 : i32
    %c0_i32_0 = arith.constant 0 : i32
    return %arg0, %c0_i32 : i32, i32
  }
}

</mosaic_0001>

<llo_original>
// kernel: tpu_custom_call.1
$region0: #{tpu_custom_call.1}
  #allocation0 [shape = 'u32[]', space=smem, size = 0x4, offset = 0x4, fixed_abs, tag = 'smem constant byte address 0x4 - core index']
  #allocation1 [shape = 'u32[144,128]{1,0:T(1,128)}', space=vmem, size = 0x12000, scoped, tag = 'internal scratch']
  %s0 = inlined_call_operand.hbm [shape: f32[8,5], index: 0, kind: input, shape index: {}]
  %s1 = inlined_call_operand.hbm [shape: f32[5,128], index: 1, kind: input, shape index: {}]
  %s2 = inlined_call_operand.hbm [shape: f32[128,128], index: 2, kind: input, shape index: {}]
  %s3 = inlined_call_operand.hbm [shape: f32[128,128], index: 3, kind: input, shape index: {}]
  %s4 = inlined_call_operand.hbm [shape: f32[128,128], index: 4, kind: input, shape index: {}]
  %s5 = inlined_call_operand.vmem [shape: f32[4,128], index: 5, kind: input, shape index: {}]
  %s6 = inlined_call_operand.hbm [shape: f32[8,128], index: 6, kind: output, shape index: {}]
  %s7 = sld [smem:[#allocation0]]
  $region54: #{tpu_custom_call.1} parent=0
    _
  %s9 = ssub.s32 1, %s7
  %s10 = scalar_select 0, %s9, %s7
  $region1: #{tpu_custom_call.1} parent=0
    #allocation2 [shape = 'u8[4096]{0}', space=vmem, size = 0x1000, scoped, tag = 'input window, operand 0, single buffered']
    #allocation3 [shape = 's32[1]{0}', space=sflag, size = 0x4, scoped, tag = 'scoped memory for tpu_custom_call.1']
    #allocation4 [shape = 's32[1]{0}', space=sflag, size = 0x4, scoped, tag = 'scoped memory for tpu_custom_call.1']
    #allocation5 [shape = 'u8[4096]{0}', space=vmem, size = 0x1000, scoped, tag = 'input window, operand 1, single buffered']
    #allocation6 [shape = 's32[1]{0}', space=sflag, size = 0x4, scoped, tag = 'scoped memory for tpu_custom_call.1']
    #allocation7 [shape = 'u8[65536]{0}', space=vmem, size = 0x10000, scoped, tag = 'input window, operand 2, single buffered']
    #allocation8 [shape = 'u8[65536]{0}', space=vmem, size = 0x10000, scoped, tag = 'input window, operand 3, single buffered']
    #allocation9 [shape = 's32[1]{0}', space=sflag, size = 0x4, scoped, tag = 'scoped memory for tpu_custom_call.1']
    #allocation10 [shape = 'u8[65536]{0}', space=vmem, size = 0x10000, scoped, tag = 'input window, operand 4, single buffered']
    #allocation11 [shape = 'u8[4096]{0}', space=vmem, size = 0x1000, scoped, tag = 'output window, operand 0, single buffered']
    %11 = vsyncpa [#allocation3], 0
    %12 = vsyncpa [#allocation6], 0
    %13 = vsyncpa [#allocation9], 0
    %14 = vsyncpa [#allocation4], 0
    // Predicated region
    $region2: #{tpu_custom_call.1} parent=1 // pred_check
      _
    $region3: #{tpu_custom_call.1} parent=1 // pred_check_branch
      %16 = sbr.rel (0) target = $region5
    $region4: #{tpu_custom_call.1} parent=1 // pred_region
      %s18 = ssub.s32 128, 128
      %19 = vsyncadd [#allocation3], %s18
      %s21 = sshll.u32 [#allocation2], 4
      %s22 = int_to_ptr.vmem [resolvable:$true] %s21
      %24 = dma.hbm_to_vmem [thread:$0]  %s0, 128, %s22, [#allocation3]
    $region5: #{tpu_custom_call.1} parent=1 // pred_fallthru
      _
    // Predicated region
    $region6: #{tpu_custom_call.1} parent=1 // pred_check
      _
    $region7: #{tpu_custom_call.1} parent=1 // pred_check_branch
      %26 = sbr.rel (0) target = $region9
    $region8: #{tpu_custom_call.1} parent=1 // pred_region
      %s28 = ssub.s32 128, 128
      %29 = vsyncadd [#allocation6], %s28
      %s31 = sshll.u32 [#allocation5], 4
      %s32 = int_to_ptr.vmem [resolvable:$true] %s31
      %34 = dma.hbm_to_vmem [thread:$0]  %s1, 128, %s32, [#allocation6]
    $region9: #{tpu_custom_call.1} parent=1 // pred_fallthru
      _
    // Predicated region
    $region10: #{tpu_custom_call.1} parent=1 // pred_check
      _
    $region11: #{tpu_custom_call.1} parent=1 // pred_check_branch
      %36 = sbr.rel (0) target = $region13
    $region12: #{tpu_custom_call.1} parent=1 // pred_region
      %s38 = ssub.s32 2048, 2048
      %39 = vsyncadd [#allocation6], %s38
      %s40 = sshll.u32 [#allocation7], 4
      %s41 = int_to_ptr.vmem [resolvable:$true] %s40
      %46 = dma.hbm_to_vmem [thread:$0]  %s2, 2048, %s41, [#allocation6], 128, 128, 8
    $region13: #{tpu_custom_call.1} parent=1 // pred_fallthru
      _
    // Predicated region
    $region14: #{tpu_custom_call.1} parent=1 // pred_check
      _
    $region15: #{tpu_custom_call.1} parent=1 // pred_check_branch
      %48 = sbr.rel (0) target = $region17
    $region16: #{tpu_custom_call.1} parent=1 // pred_region
      %s50 = ssub.s32 2048, 2048
      %51 = vsyncadd [#allocation9], %s50
      %s52 = sshll.u32 [#allocation8], 4
      %s53 = int_to_ptr.vmem [resolvable:$true] %s52
      %58 = dma.hbm_to_vmem [thread:$0]  %s3, 2048, %s53, [#allocation9], 128, 128, 8
    $region17: #{tpu_custom_call.1} parent=1 // pred_fallthru
      _
    // Predicated region
    $region18: #{tpu_custom_call.1} parent=1 // pred_check
      _
    $region19: #{tpu_custom_call.1} parent=1 // pred_check_branch
      %60 = sbr.rel (0) target = $region21
    $region20: #{tpu_custom_call.1} parent=1 // pred_region
      %s62 = ssub.s32 2048, 2048
      %63 = vsyncadd [#allocation9], %s62
      %s64 = sshll.u32 [#allocation10], 4
      %s65 = int_to_ptr.vmem [resolvable:$true] %s64
      %70 = dma.hbm_to_vmem [thread:$0]  %s4, 2048, %s65, [#allocation9], 128, 128, 8
    $region21: #{tpu_custom_call.1} parent=1 // pred_fallthru
      _
    // Predicated region
    $region22: #{tpu_custom_call.1} parent=1 // pred_check
      _
    $region23: #{tpu_custom_call.1} parent=1 // pred_check_branch
      %72 = sbr.rel (0) target = $region25
    $region24: #{tpu_custom_call.1} parent=1 // pred_region
      _
    $region25: #{tpu_custom_call.1} parent=1 // pred_fallthru
      _
    // Predicated region
    $region26: #{tpu_custom_call.1} parent=1 // pred_check
      _
    $region27: #{tpu_custom_call.1} parent=1 // pred_check_branch
      %74 = sbr.rel (0) target = $region29
    $region28: #{tpu_custom_call.1} parent=1 // pred_region
      %75 = dma.done [#allocation3], 128
    $region29: #{tpu_custom_call.1} parent=1 // pred_fallthru
      _
    // Predicated region
    $region30: #{tpu_custom_call.1} parent=1 // pred_check
      _
    $region31: #{tpu_custom_call.1} parent=1 // pred_check_branch
      %77 = sbr.rel (0) target = $region33
    $region32: #{tpu_custom_call.1} parent=1 // pred_region
      %78 = dma.done [#allocation6], 128
    $region33: #{tpu_custom_call.1} parent=1 // pred_fallthru
      _
    // Predicated region
    $region34: #{tpu_custom_call.1} parent=1 // pred_check
      _
    $region35: #{tpu_custom_call.1} parent=1 // pred_check_branch
      %80 = sbr.rel (0) target = $region37
    $region36: #{tpu_custom_call.1} parent=1 // pred_region
      %81 = dma.done [#allocation6], 2048
    $region37: #{tpu_custom_call.1} parent=1 // pred_fallthru
      _
    // Predicated region
    $region38: #{tpu_custom_call.1} parent=1 // pred_check
      _
    $region39: #{tpu_custom_call.1} parent=1 // pred_check_branch
      %83 = sbr.rel (0) target = $region41
    $region40: #{tpu_custom_call.1} parent=1 // pred_region
      %84 = dma.done [#allocation9], 2048
    $region41: #{tpu_custom_call.1} parent=1 // pred_fallthru
      _
    // Predicated region
    $region42: #{tpu_custom_call.1} parent=1 // pred_check
      _
    $region43: #{tpu_custom_call.1} parent=1 // pred_check_branch
      %86 = sbr.rel (0) target = $region45
    $region44: #{tpu_custom_call.1} parent=1 // pred_region
      %87 = dma.done [#allocation9], 2048
    $region45: #{tpu_custom_call.1} parent=1 // pred_fallthru
      _
    %v88 = vld [vmem:[#allocation2] sm:$0xff]
    %v89 = vld [vmem:[#allocation5] sm:$0x1f]
    %v90 = vld [vmem:[%s5] sm:$0x1]
    %v91 = vlaneseq
    %v92 = vshrl.u32 %v91, 7
    %v93 = vsub.s32 0, %v92
    %v94 = vrot.slane %v90, %v93
    %vm95 = vcmask 39936
    %v97 = vsel %vm95, %v88, 0
    %vm99 = vcmask 1044480
    %v101 = vsel %vm99, %v89, 0
    %103 = vmatprep.subr.mxu0 0.0
    %104 = vmatpush1.msra.mxu0 %v101
    %105 = vmatprep.subr.mxu0 0.0
    %106 = vmatpush1.msra.mxu0 0.0
    %107 = vmatprep.subr.mxu0 0.0
    %108 = vmatpush1.msra.mxu0 0.0
    %109 = vmatprep.subr.mxu0 0.0
    %110 = vmatpush1.msra.mxu0 0.0
    %111 = vmatprep.subr.mxu0 0.0
    %112 = vmatpush1.msra.mxu0 0.0
    %113 = vmatprep.subr.mxu0 0.0
    %114 = vmatpush1.msra.mxu0 0.0
    %115 = vmatprep.subr.mxu0 0.0
    %116 = vmatpush1.msra.mxu0 0.0
    %117 = vmatprep.subr.mxu0 0.0
    %118 = vmatpush1.msra.mxu0 0.0
    %119 = vmatprep.subr.mxu0 0.0
    %120 = vmatpush1.msra.mxu0 0.0
    %121 = vmatprep.subr.mxu0 0.0
    %122 = vmatpush1.msra.mxu0 0.0
    %123 = vmatprep.subr.mxu0 0.0
    %124 = vmatpush1.msra.mxu0 0.0
    %125 = vmatprep.subr.mxu0 0.0
    %126 = vmatpush1.msra.mxu0 0.0
    %127 = vmatprep.subr.mxu0 0.0
    %128 = vmatpush1.msra.mxu0 0.0
    %129 = vmatprep.subr.mxu0 0.0
    %130 = vmatpush1.msra.mxu0 0.0
    %131 = vmatprep.subr.mxu0 0.0
    %132 = vmatpush1.msra.mxu0 0.0
    %133 = vmatprep.subr.mxu0 0.0
    %134 = vmatpush1.msra.mxu0 0.0
    %135 = vmatprep.subr.mxu0 0.0
    %136 = vmatpush1.msra.mxu0 0.0
    %137 = vmatprep.subr.mxu0 0.0
    %138 = vmatpush1.msra.mxu0 0.0
    %139 = vmatprep.subr.mxu0 0.0
    %140 = vmatpush1.msra.mxu0 0.0
    %141 = vmatprep.subr.mxu0 0.0
    %142 = vmatpush1.msra.mxu0 0.0
    %143 = vmatprep.subr.mxu0 0.0
    %144 = vmatpush1.msra.mxu0 0.0
    %145 = vmatprep.subr.mxu0 0.0
    %146 = vmatpush1.msra.mxu0 0.0
    %147 = vmatprep.subr.mxu0 0.0
    %148 = vmatpush1.msra.mxu0 0.0
    %149 = vmatprep.subr.mxu0 0.0
    %150 = vmatpush1.msra.mxu0 0.0
    %151 = vmatprep.subr.mxu0 0.0
    %152 = vmatpush1.msra.mxu0 0.0
    %153 = vmatprep.subr.mxu0 0.0
    %154 = vmatpush1.msra.mxu0 0.0
    %155 = vmatprep.subr.mxu0 0.0
    %156 = vmatpush1.msra.mxu0 0.0
    %157 = vmatprep.subr.mxu0 0.0
    %158 = vmatpush1.msra.mxu0 0.0
    %159 = vmatprep.subr.mxu0 0.0
    %160 = vmatpush1.msra.mxu0 0.0
    %161 = vmatprep.subr.mxu0 0.0
    %162 = vmatpush1.msra.mxu0 0.0
    %163 = vmatprep.subr.mxu0 0.0
    %164 = vmatpush1.msra.mxu0 0.0
    %165 = vmatprep.subr.mxu0 0.0
    %166 = vmatpush1.msra.mxu0 0.0
    %167 = vmatprep.mubr.f32.mxu0 0.0
    %168 = vmatmul.mubr.f32.gmra.mrb[0].mxu0 %v97
    %v169 = vpop.f32.mrb[0].mxu0
    %v170 = vadd.f32 %v94, %v169
    %v171 = vpop.f32.mrb[0].mxu0
    %172 = vdwg.mxu0
    %v173 = vmax.f32 %v170, 0.0
    %v174 = vld [vmem:[#allocation7] sm:$0xff]
    %v175 = vld [vmem:[#allocation7 + $0x8] sm:$0xff]
    %v176 = vld [vmem:[#allocation7 + $0x10] sm:$0xff]
    %v177 = vld [vmem:[#allocation7 + $0x18] sm:$0xff]
    %v178 = vld [vmem:[#allocation7 + $0x20] sm:$0xff]
    %v179 = vld [vmem:[#allocation7 + $0x28] sm:$0xff]
    %v180 = vld [vmem:[#allocation7 + $0x30] sm:$0xff]
    %v181 = vld [vmem:[#allocation7 + $0x38] sm:$0xff]
    %v182 = vld [vmem:[#allocation7 + $0x40] sm:$0xff]
    %v183 = vld [vmem:[#allocation7 + $0x48] sm:$0xff]
    %v184 = vld [vmem:[#allocation7 + $0x50] sm:$0xff]
    %v185 = vld [vmem:[#allocation7 + $0x58] sm:$0xff]
    %v186 = vld [vmem:[#allocation7 + $0x60] sm:$0xff]
    %v187 = vld [vmem:[#allocation7 + $0x68] sm:$0xff]
    %v188 = vld [vmem:[#allocation7 + $0x70] sm:$0xff]
    %v189 = vld [vmem:[#allocation7 + $0x78] sm:$0xff]
    %v190 = vld [vmem:[%s5 + $0x1] sm:$0x1]
    %v191 = vlaneseq
    %v192 = vshrl.u32 %v191, 7
    %v193 = vsub.s32 0, %v192
    %v194 = vrot.slane %v190, %v193
    %195 = vmatprep.subr.mxu0 0.0
    %196 = vmatpush1.msra.mxu0 %v174
    %197 = vmatprep.subr.mxu0 0.0
    %198 = vmatpush1.msra.mxu0 %v175
    %199 = vmatprep.subr.mxu0 0.0
    %200 = vmatpush1.msra.mxu0 %v176
    %201 = vmatprep.subr.mxu0 0.0
    %202 = vmatpush1.msra.mxu0 %v177
    %203 = vmatprep.subr.mxu0 0.0
    %204 = vmatpush1.msra.mxu0 %v178
    %205 = vmatprep.subr.mxu0 0.0
    %206 = vmatpush1.msra.mxu0 %v179
    %207 = vmatprep.subr.mxu0 0.0
    %208 = vmatpush1.msra.mxu0 %v180
    %209 = vmatprep.subr.mxu0 0.0
    %210 = vmatpush1.msra.mxu0 %v181
    %211 = vmatprep.subr.mxu0 0.0
    %212 = vmatpush1.msra.mxu0 %v182
    %213 = vmatprep.subr.mxu0 0.0
    %214 = vmatpush1.msra.mxu0 %v183
    %215 = vmatprep.subr.mxu0 0.0
    %216 = vmatpush1.msra.mxu0 %v184
    %217 = vmatprep.subr.mxu0 0.0
    %218 = vmatpush1.msra.mxu0 %v185
    %219 = vmatprep.subr.mxu0 0.0
    %220 = vmatpush1.msra.mxu0 %v186
    %221 = vmatprep.subr.mxu0 0.0
    %222 = vmatpush1.msra.mxu0 %v187
    %223 = vmatprep.subr.mxu0 0.0
    %224 = vmatpush1.msra.mxu0 %v188
    %225 = vmatprep.subr.mxu0 0.0
    %226 = vmatpush1.msra.mxu0 %v189
    %227 = vmatprep.subr.mxu0 0.0
    %228 = vmatpush1.msra.mxu0 0.0
    %229 = vmatprep.subr.mxu0 0.0
    %230 = vmatpush1.msra.mxu0 0.0
    %231 = vmatprep.subr.mxu0 0.0
    %232 = vmatpush1.msra.mxu0 0.0
    %233 = vmatprep.subr.mxu0 0.0
    %234 = vmatpush1.msra.mxu0 0.0
    %235 = vmatprep.subr.mxu0 0.0
    %236 = vmatpush1.msra.mxu0 0.0
    %237 = vmatprep.subr.mxu0 0.0
    %238 = vmatpush1.msra.mxu0 0.0
    %239 = vmatprep.subr.mxu0 0.0
    %240 = vmatpush1.msra.mxu0 0.0
    %241 = vmatprep.subr.mxu0 0.0
    %242 = vmatpush1.msra.mxu0 0.0
    %243 = vmatprep.subr.mxu0 0.0
    %244 = vmatpush1.msra.mxu0 0.0
    %245 = vmatprep.subr.mxu0 0.0
    %246 = vmatpush1.msra.mxu0 0.0
    %247 = vmatprep.subr.mxu0 0.0
    %248 = vmatpush1.msra.mxu0 0.0
    %249 = vmatprep.subr.mxu0 0.0
    %250 = vmatpush1.msra.mxu0 0.0
    %251 = vmatprep.subr.mxu0 0.0
    %252 = vmatpush1.msra.mxu0 0.0
    %253 = vmatprep.subr.mxu0 0.0
    %254 = vmatpush1.msra.mxu0 0.0
    %255 = vmatprep.subr.mxu0 0.0
    %256 = vmatpush1.msra.mxu0 0.0
    %257 = vmatprep.subr.mxu0 0.0
    %258 = vmatpush1.msra.mxu0 0.0
    %259 = vmatprep.mubr.f32.mxu0 0.0
    %260 = vmatmul.mubr.f32.gmra.mrb[0].mxu0 %v173
    %v261 = vpop.f32.mrb[0].mxu0
    %v262 = vadd.f32 %v194, %v261
    %v263 = vpop.f32.mrb[0].mxu0
    %264 = vdwg.mxu0
    %v265 = vmax.f32 %v262, 0.0
    %v266 = vld [vmem:[#allocation8] sm:$0xff]
    %v267 = vld [vmem:[#allocation8 + $0x8] sm:$0xff]
    %v268 = vld [vmem:[#allocation8 + $0x10] sm:$0xff]
    %v269 = vld [vmem:[#allocation8 + $0x18] sm:$0xff]
    %v270 = vld [vmem:[#allocation8 + $0x20] sm:$0xff]
    %v271 = vld [vmem:[#allocation8 + $0x28] sm:$0xff]
    %v272 = vld [vmem:[#allocation8 + $0x30] sm:$0xff]
    %v273 = vld [vmem:[#allocation8 + $0x38] sm:$0xff]
    %v274 = vld [vmem:[#allocation8 + $0x40] sm:$0xff]
    %v275 = vld [vmem:[#allocation8 + $0x48] sm:$0xff]
    %v276 = vld [vmem:[#allocation8 + $0x50] sm:$0xff]
    %v277 = vld [vmem:[#allocation8 + $0x58] sm:$0xff]
    %v278 = vld [vmem:[#allocation8 + $0x60] sm:$0xff]
    %v279 = vld [vmem:[#allocation8 + $0x68] sm:$0xff]
    %v280 = vld [vmem:[#allocation8 + $0x70] sm:$0xff]
    %v281 = vld [vmem:[#allocation8 + $0x78] sm:$0xff]
    %v282 = vld [vmem:[%s5 + $0x2] sm:$0x1]
    %v283 = vlaneseq
    %v284 = vshrl.u32 %v283, 7
    %v285 = vsub.s32 0, %v284
    %v286 = vrot.slane %v282, %v285
    %287 = vmatprep.subr.mxu0 0.0
    %288 = vmatpush1.msra.mxu0 %v266
    %289 = vmatprep.subr.mxu0 0.0
    %290 = vmatpush1.msra.mxu0 %v267
    %291 = vmatprep.subr.mxu0 0.0
    %292 = vmatpush1.msra.mxu0 %v268
    %293 = vmatprep.subr.mxu0 0.0
    %294 = vmatpush1.msra.mxu0 %v269
    %295 = vmatprep.subr.mxu0 0.0
    %296 = vmatpush1.msra.mxu0 %v270
    %297 = vmatprep.subr.mxu0 0.0
    %298 = vmatpush1.msra.mxu0 %v271
    %299 = vmatprep.subr.mxu0 0.0
    %300 = vmatpush1.msra.mxu0 %v272
    %301 = vmatprep.subr.mxu0 0.0
    %302 = vmatpush1.msra.mxu0 %v273
    %303 = vmatprep.subr.mxu0 0.0
    %304 = vmatpush1.msra.mxu0 %v274
    %305 = vmatprep.subr.mxu0 0.0
    %306 = vmatpush1.msra.mxu0 %v275
    %307 = vmatprep.subr.mxu0 0.0
    %308 = vmatpush1.msra.mxu0 %v276
    %309 = vmatprep.subr.mxu0 0.0
    %310 = vmatpush1.msra.mxu0 %v277
    %311 = vmatprep.subr.mxu0 0.0
    %312 = vmatpush1.msra.mxu0 %v278
    %313 = vmatprep.subr.mxu0 0.0
    %314 = vmatpush1.msra.mxu0 %v279
    %315 = vmatprep.subr.mxu0 0.0
    %316 = vmatpush1.msra.mxu0 %v280
    %317 = vmatprep.subr.mxu0 0.0
    %318 = vmatpush1.msra.mxu0 %v281
    %319 = vmatprep.subr.mxu0 0.0
    %320 = vmatpush1.msra.mxu0 0.0
    %321 = vmatprep.subr.mxu0 0.0
    %322 = vmatpush1.msra.mxu0 0.0
    %323 = vmatprep.subr.mxu0 0.0
    %324 = vmatpush1.msra.mxu0 0.0
    %325 = vmatprep.subr.mxu0 0.0
    %326 = vmatpush1.msra.mxu0 0.0
    %327 = vmatprep.subr.mxu0 0.0
    %328 = vmatpush1.msra.mxu0 0.0
    %329 = vmatprep.subr.mxu0 0.0
    %330 = vmatpush1.msra.mxu0 0.0
    %331 = vmatprep.subr.mxu0 0.0
    %332 = vmatpush1.msra.mxu0 0.0
    %333 = vmatprep.subr.mxu0 0.0
    %334 = vmatpush1.msra.mxu0 0.0
    %335 = vmatprep.subr.mxu0 0.0
    %336 = vmatpush1.msra.mxu0 0.0
    %337 = vmatprep.subr.mxu0 0.0
    %338 = vmatpush1.msra.mxu0 0.0
    %339 = vmatprep.subr.mxu0 0.0
    %340 = vmatpush1.msra.mxu0 0.0
    %341 = vmatprep.subr.mxu0 0.0
    %342 = vmatpush1.msra.mxu0 0.0
    %343 = vmatprep.subr.mxu0 0.0
    %344 = vmatpush1.msra.mxu0 0.0
    %345 = vmatprep.subr.mxu0 0.0
    %346 = vmatpush1.msra.mxu0 0.0
    %347 = vmatprep.subr.mxu0 0.0
    %348 = vmatpush1.msra.mxu0 0.0
    %349 = vmatprep.subr.mxu0 0.0
    %350 = vmatpush1.msra.mxu0 0.0
    %351 = vmatprep.mubr.f32.mxu0 0.0
    %352 = vmatmul.mubr.f32.gmra.mrb[0].mxu0 %v265
    %v353 = vpop.f32.mrb[0].mxu0
    %v354 = vadd.f32 %v286, %v353
    %v355 = vpop.f32.mrb[0].mxu0
    %356 = vdwg.mxu0
    %v357 = vmax.f32 %v354, 0.0
    %v358 = vld [vmem:[#allocation10] sm:$0xff]
    %v359 = vld [vmem:[#allocation10 + $0x8] sm:$0xff]
    %v360 = vld [vmem:[#allocation10 + $0x10] sm:$0xff]
    %v361 = vld [vmem:[#allocation10 + $0x18] sm:$0xff]
    %v362 = vld [vmem:[#allocation10 + $0x20] sm:$0xff]
    %v363 = vld [vmem:[#allocation10 + $0x28] sm:$0xff]
    %v364 = vld [vmem:[#allocation10 + $0x30] sm:$0xff]
    %v365 = vld [vmem:[#allocation10 + $0x38] sm:$0xff]
    %v366 = vld [vmem:[#allocation10 + $0x40] sm:$0xff]
    %v367 = vld [vmem:[#allocation10 + $0x48] sm:$0xff]
    %v368 = vld [vmem:[#allocation10 + $0x50] sm:$0xff]
    %v369 = vld [vmem:[#allocation10 + $0x58] sm:$0xff]
    %v370 = vld [vmem:[#allocation10 + $0x60] sm:$0xff]
    %v371 = vld [vmem:[#allocation10 + $0x68] sm:$0xff]
    %v372 = vld [vmem:[#allocation10 + $0x70] sm:$0xff]
    %v373 = vld [vmem:[#allocation10 + $0x78] sm:$0xff]
    %v374 = vld [vmem:[%s5 + $0x3] sm:$0x1]
    %v375 = vlaneseq
    %v376 = vshrl.u32 %v375, 7
    %v377 = vsub.s32 0, %v376
    %v378 = vrot.slane %v374, %v377
    %379 = vmatprep.subr.mxu0 0.0
    %380 = vmatpush1.msra.mxu0 %v358
    %381 = vmatprep.subr.mxu0 0.0
    %382 = vmatpush1.msra.mxu0 %v359
    %383 = vmatprep.subr.mxu0 0.0
    %384 = vmatpush1.msra.mxu0 %v360
    %385 = vmatprep.subr.mxu0 0.0
    %386 = vmatpush1.msra.mxu0 %v361
    %387 = vmatprep.subr.mxu0 0.0
    %388 = vmatpush1.msra.mxu0 %v362
    %389 = vmatprep.subr.mxu0 0.0
    %390 = vmatpush1.msra.mxu0 %v363
    %391 = vmatprep.subr.mxu0 0.0
    %392 = vmatpush1.msra.mxu0 %v364
    %393 = vmatprep.subr.mxu0 0.0
    %394 = vmatpush1.msra.mxu0 %v365
    %395 = vmatprep.subr.mxu0 0.0
    %396 = vmatpush1.msra.mxu0 %v366
    %397 = vmatprep.subr.mxu0 0.0
    %398 = vmatpush1.msra.mxu0 %v367
    %399 = vmatprep.subr.mxu0 0.0
    %400 = vmatpush1.msra.mxu0 %v368
    %401 = vmatprep.subr.mxu0 0.0
    %402 = vmatpush1.msra.mxu0 %v369
    %403 = vmatprep.subr.mxu0 0.0
    %404 = vmatpush1.msra.mxu0 %v370
    %405 = vmatprep.subr.mxu0 0.0
    %406 = vmatpush1.msra.mxu0 %v371
    %407 = vmatprep.subr.mxu0 0.0
    %408 = vmatpush1.msra.mxu0 %v372
    %409 = vmatprep.subr.mxu0 0.0
    %410 = vmatpush1.msra.mxu0 %v373
    %411 = vmatprep.subr.mxu0 0.0
    %412 = vmatpush1.msra.mxu0 0.0
    %413 = vmatprep.subr.mxu0 0.0
    %414 = vmatpush1.msra.mxu0 0.0
    %415 = vmatprep.subr.mxu0 0.0
    %416 = vmatpush1.msra.mxu0 0.0
    %417 = vmatprep.subr.mxu0 0.0
    %418 = vmatpush1.msra.mxu0 0.0
    %419 = vmatprep.subr.mxu0 0.0
    %420 = vmatpush1.msra.mxu0 0.0
    %421 = vmatprep.subr.mxu0 0.0
    %422 = vmatpush1.msra.mxu0 0.0
    %423 = vmatprep.subr.mxu0 0.0
    %424 = vmatpush1.msra.mxu0 0.0
    %425 = vmatprep.subr.mxu0 0.0
    %426 = vmatpush1.msra.mxu0 0.0
    %427 = vmatprep.subr.mxu0 0.0
    %428 = vmatpush1.msra.mxu0 0.0
    %429 = vmatprep.subr.mxu0 0.0
    %430 = vmatpush1.msra.mxu0 0.0
    %431 = vmatprep.subr.mxu0 0.0
    %432 = vmatpush1.msra.mxu0 0.0
    %433 = vmatprep.subr.mxu0 0.0
    %434 = vmatpush1.msra.mxu0 0.0
    %435 = vmatprep.subr.mxu0 0.0
    %436 = vmatpush1.msra.mxu0 0.0
    %437 = vmatprep.subr.mxu0 0.0
    %438 = vmatpush1.msra.mxu0 0.0
    %439 = vmatprep.subr.mxu0 0.0
    %440 = vmatpush1.msra.mxu0 0.0
    %441 = vmatprep.subr.mxu0 0.0
    %442 = vmatpush1.msra.mxu0 0.0
    %443 = vmatprep.mubr.f32.mxu0 0.0
    %444 = vmatmul.mubr.f32.gmra.mrb[0].mxu0 %v357
    %v445 = vpop.f32.mrb[0].mxu0
    %v446 = vadd.f32 %v378, %v445
    %v447 = vpop.f32.mrb[0].mxu0
    %448 = vdwg.mxu0
    %449 = vst [vmem:[#allocation11] sm:$0xff] %v446
    // Predicated region
    $region46: #{tpu_custom_call.1} parent=1 // pred_check
      _
    $region47: #{tpu_custom_call.1} parent=1 // pred_check_branch
      %451 = sbr.rel (0) target = $region49
    $region48: #{tpu_custom_call.1} parent=1 // pred_region
      %s453 = ssub.s32 128, 128
      %454 = vsyncadd [#allocation4], %s453
      %s456 = sshll.u32 [#allocation11], 4
      %s457 = int_to_ptr.vmem [resolvable:$true] %s456
      %459 = dma.vmem_to_hbm [thread:$0]  %s457, 128, %s6, [#allocation4]
    $region49: #{tpu_custom_call.1} parent=1 // pred_fallthru
      _
    // Predicated region
    $region50: #{tpu_custom_call.1} parent=1 // pred_check
      _
    $region51: #{tpu_custom_call.1} parent=1 // pred_check_branch
      %461 = sbr.rel (0) target = $region53
    $region52: #{tpu_custom_call.1} parent=1 // pred_region
      %462 = dma.done [#allocation4], 128
    $region53: #{tpu_custom_call.1} parent=1 // pred_fallthru
      _
    %463 = vsyncpa [#allocation3], 1
    %464 = vsyncpa [#allocation6], 1
    %465 = vsyncpa [#allocation9], 1
    %466 = vsyncpa [#allocation4], 1

</llo_original>
